<compile_context>
chip_gen: v7x
topology: tpu7x:2x2x1
jax: 0.10.0
libtpu: 0.0.40
codegen_flags: <defaults>
</compile_context>

<pallas_src>
import jax
import jax.numpy as jnp
from jax.experimental import pallas as pl
from jax.experimental.pallas import tpu as pltpu

HIDDEN = 256
LANES = 128  # batch rows per output lane-group


def _round_up(n, m):
    return ((n + m - 1) // m) * m


def _choose_batch_tile(B, block_b):
    """Batch tile: multiple of 128, capped at block_b, >=2 grid steps for big B."""
    tb = max(LANES, min(block_b, _round_up(max(B, 1), LANES)))
    tb = _round_up(tb, LANES)
    if B >= 2 * LANES:
        half = _round_up(-(-B // 2), LANES)
        # Split into >= 2 grid steps (lets v7x shard the batch across both
        # TensorCores) if it adds at most one extra 128-row tile of padding.
        if half < tb and 2 * half <= _round_up(B, tb) + LANES:
            tb = half
    return tb


def _disc_kernel(x_ref, w1_ref, b1_ref, w2_ref, b2_ref, w3_ref, b3_ref, o_ref):
    compute_dtype = w1_ref.dtype
    x = x_ref[...].astype(compute_dtype)

    # Layer 1: Linear(input_dim, 256) + ReLU   (MXU, f32 accumulation)
    h1 = jnp.dot(x, w1_ref[...], preferred_element_type=jnp.float32) + b1_ref[...]
    h1 = jnp.maximum(h1, 0.0).astype(compute_dtype)

    # Layer 2: Linear(256, 256) + ReLU
    h2 = jnp.dot(h1, w2_ref[...], preferred_element_type=jnp.float32) + b2_ref[...]
    h2 = jnp.maximum(h2, 0.0)  # keep f32 for the VPU epilogue (v5e has no bf16 VPU)

    # Layer 3: Linear(256, 1) + Sigmoid as a narrow VPU/XLU epilogue.
    # Split the batch tile into groups of 128 rows (leading-dim split only),
    # multiply by the weight row and reduce over the 256 features: the result
    # lands directly in a lane-dense (tb//128, 128) layout (batch on lanes).
    g, lanes = o_ref.shape                       # (tb // 128, 128)
    h2r = h2.reshape(g, lanes, HIDDEN)           # (g, 128, 256)
    logits = jnp.sum(h2r * w3_ref[...], axis=-1)  # (g, 128)  VPU mul + lane reduce
    o_ref[...] = jax.nn.sigmoid(logits + b3_ref[...]).astype(o_ref.dtype)


def discriminator_forward(x, params, *, block_b=1024, compute_dtype=jnp.bfloat16):
    """x: (B, input_dim).  params: dict of w1,b1,w2,b2,w3,b3.

    Returns (B, 1) float32 sigmoid outputs, same semantics as the PyTorch
    Discriminator forward.  compute_dtype=jnp.float32 gives exact f32 math.
    """
    B, D = x.shape
    # MXU weights in compute dtype; biases and the final (VPU) layer stay f32.
    w1c = params["w1"].astype(compute_dtype)              # (D, 256)
    w2c = params["w2"].astype(compute_dtype)              # (256, 256)
    b1f = params["b1"].reshape(1, HIDDEN).astype(jnp.float32)
    b2f = params["b2"].reshape(1, HIDDEN).astype(jnp.float32)
    w3f = params["w3"].reshape(1, HIDDEN).astype(jnp.float32)   # row vector
    b3f = params["b3"].reshape(1, 1).astype(jnp.float32)

    # --- Batch tiling (pad B up to a multiple of the tile; tile is 128k). ---
    tb = _choose_batch_tile(B, block_b)
    Bp = _round_up(B, tb)
    if Bp != B:
        x = jnp.pad(x, ((0, Bp - B), (0, 0)))
    num_tiles = Bp // tb
    grid = (num_tiles,)
    g = tb // LANES  # lane-groups per tile

    cdt_size = jnp.dtype(compute_dtype).itemsize
    x_size = jnp.dtype(x.dtype).itemsize
    flops = 2 * Bp * (D * HIDDEN + HIDDEN * HIDDEN + HIDDEN)
    bytes_accessed = (
        Bp * D * x_size
        + (w1c.size + w2c.size) * cdt_size
        + (b1f.size + b2f.size + w3f.size + b3f.size) * 4
        + Bp * 4
    )
    cost = pl.CostEstimate(flops=flops, transcendentals=Bp, bytes_accessed=bytes_accessed)

    out = pl.pallas_call(
        _disc_kernel,
        out_shape=jax.ShapeDtypeStruct((num_tiles, g, LANES), jnp.float32),
        grid=grid,
        in_specs=[
            pl.BlockSpec((tb, D), lambda i: (i, 0)),            # x tile (pipelined)
            pl.BlockSpec((D, HIDDEN), lambda i: (0, 0)),        # w1 (resident)
            pl.BlockSpec((1, HIDDEN), lambda i: (0, 0)),        # b1
            pl.BlockSpec((HIDDEN, HIDDEN), lambda i: (0, 0)),   # w2
            pl.BlockSpec((1, HIDDEN), lambda i: (0, 0)),        # b2
            pl.BlockSpec((1, HIDDEN), lambda i: (0, 0)),        # w3 row (f32, VPU)
            pl.BlockSpec((1, 1), lambda i: (0, 0)),             # b3 scalar
        ],
        # Per-step output slab: last two block dims == full array dims, so the
        # store is a full unmasked lane-dense tile regardless of tb//128.
        out_specs=pl.BlockSpec((None, g, LANES), lambda i: (i, 0, 0)),
        compiler_params=pltpu.CompilerParams(
            dimension_semantics=("parallel",),
            vmem_limit_bytes=32 << 20,
        ),
        cost_estimate=cost,
    )(x, w1c, b1f, w2c, b2f, w3f, b3f)

    # (num_tiles, tb//128, 128) row-major == batch order; slice away padding.
    return out.reshape(Bp, 1)[:B]


def init_params(key, input_dim):
    """Deterministic init mimicking torch.nn.Linear default (U(-1/sqrt(fan_in), +))."""
    def linear(k, fan_in, fan_out):
        kw, kb = jax.random.split(k)
        bound = 1.0 / jnp.sqrt(float(fan_in))
        w = jax.random.uniform(kw, (fan_in, fan_out), jnp.float32, -bound, bound)
        b = jax.random.uniform(kb, (1, fan_out), jnp.float32, -bound, bound)
        return w, b

    k1, k2, k3 = jax.random.split(key, 3)
    w1, b1 = linear(k1, input_dim, HIDDEN)
    w2, b2 = linear(k2, HIDDEN, HIDDEN)
    w3, b3 = linear(k3, HIDDEN, 1)
    return {"w1": w1, "b1": b1, "w2": w2, "b2": b2, "w3": w3, "b3": b3}


def reference_forward(x, p):
    h1 = jnp.maximum(x @ p["w1"] + p["b1"], 0.0)
    h2 = jnp.maximum(h1 @ p["w2"] + p["b2"], 0.0)
    return jax.nn.sigmoid(h2 @ p["w3"] + p["b3"])


if __name__ == "__main__":
    key = jax.random.PRNGKey(0)
    kx, kp = jax.random.split(key)

    batch, input_dim = 8, 32
    x = jax.random.normal(kx, (batch, input_dim), jnp.float32)
    params = init_params(kp, input_dim)
    ref = reference_forward(x, params)

    # Exact-precision path (f32 MXU) against the f32 reference.
    out_f32 = jax.block_until_ready(
        discriminator_forward(x, params, compute_dtype=jnp.float32)
    )
    assert out_f32.shape == (batch, 1), out_f32.shape
    assert jnp.allclose(out_f32, ref, atol=1e-5, rtol=1e-5), (out_f32, ref)

    # Default bf16-MXU path (f32 accumulation); looser tolerance is expected.
    out_bf16 = jax.block_until_ready(discriminator_forward(x, params))
    assert out_bf16.shape == (batch, 1), out_bf16.shape
    assert jnp.allclose(out_bf16, ref, atol=5e-2), float(jnp.max(jnp.abs(out_bf16 - ref)))

    # Non-tile-multiple batch -> padding + >=2 grid steps (multi-tile path).
    x2 = jax.random.normal(kx, (300, input_dim), jnp.float32)
    out2 = jax.block_until_ready(
        discriminator_forward(x2, params, compute_dtype=jnp.float32)
    )
    ref2 = reference_forward(x2, params)
    assert out2.shape == (300, 1), out2.shape
    assert jnp.allclose(out2, ref2, atol=1e-5, rtol=1e-5)

    print("KERNEL_OK")
</pallas_src>

<mosaic_0001>
module attributes {stable_mosaic.version = 11 : i64} {
  func.func @_disc_kernel(%arg0: i32, %arg1: memref<128x32xf32, #tpu.memory_space<vmem>>, %arg2: memref<32x256xf32, #tpu.memory_space<vmem>>, %arg3: memref<1x256xf32, #tpu.memory_space<vmem>>, %arg4: memref<256x256xf32, #tpu.memory_space<vmem>>, %arg5: memref<1x256xf32, #tpu.memory_space<vmem>>, %arg6: memref<1x256xf32, #tpu.memory_space<vmem>>, %arg7: memref<1x1xf32, #tpu.memory_space<vmem>>, %arg8: memref<1x1x128xf32, #tpu.memory_space<vmem>>) attributes {dimension_semantics = [#tpu.dimension_semantics<parallel>], iteration_bounds = array<i64: 1>, scalar_prefetch = 0 : i64, scratch_operands = 0 : i64, tpu.core_type = #tpu.core_type<tc>, window_params = [{transform_indices = @transform_0, window_bounds = array<i64: 128, 32>}, {pipeline_mode = #tpu.pipeline_mode<synchronous>, transform_indices = @transform_1, window_bounds = array<i64: 32, 256>}, {pipeline_mode = #tpu.pipeline_mode<synchronous>, transform_indices = @transform_2, window_bounds = array<i64: 1, 256>}, {pipeline_mode = #tpu.pipeline_mode<synchronous>, transform_indices = @transform_3, window_bounds = array<i64: 256, 256>}, {pipeline_mode = #tpu.pipeline_mode<synchronous>, transform_indices = @transform_4, window_bounds = array<i64: 1, 256>}, {pipeline_mode = #tpu.pipeline_mode<synchronous>, transform_indices = @transform_5, window_bounds = array<i64: 1, 256>}, {pipeline_mode = #tpu.pipeline_mode<synchronous>, transform_indices = @transform_6, window_bounds = array<i64: 1, 1>}, {transform_indices = @transform_7, window_bounds = array<i64: 1, 1, 128>}]} {
    %c0 = arith.constant 0 : index
    %c0_0 = arith.constant 0 : index
    %0 = vector.load %arg1[%c0, %c0_0] : memref<128x32xf32, #tpu.memory_space<vmem>>, vector<128x32xf32>
    %c0_1 = arith.constant 0 : index
    %c0_2 = arith.constant 0 : index
    %1 = vector.load %arg2[%c0_1, %c0_2] : memref<32x256xf32, #tpu.memory_space<vmem>>, vector<32x256xf32>
    %cst = arith.constant dense<0.000000e+00> : vector<128x256xf32>
    %2 = tpu.matmul %0, %1, %cst {dimension_numbers = #tpu.dot_dimension_numbers<[1], [0], [0], [1], [0, 0, 1, 1], [], []>} : vector<128x32xf32>, vector<32x256xf32>, vector<128x256xf32> -> vector<128x256xf32>
    %c0_3 = arith.constant 0 : index
    %c0_4 = arith.constant 0 : index
    %3 = vector.load %arg3[%c0_3, %c0_4] : memref<1x256xf32, #tpu.memory_space<vmem>>, vector<1x256xf32>
    %4 = vector.broadcast %3 : vector<1x256xf32> to vector<128x256xf32>
    %5 = arith.addf %2, %4 : vector<128x256xf32>
    %cst_5 = arith.constant 0.000000e+00 : f32
    %6 = vector.broadcast %cst_5 : f32 to vector<128x256xf32>
    %7 = arith.maximumf %5, %6 : vector<128x256xf32>
    %c0_6 = arith.constant 0 : index
    %c0_7 = arith.constant 0 : index
    %8 = vector.load %arg4[%c0_6, %c0_7] : memref<256x256xf32, #tpu.memory_space<vmem>>, vector<256x256xf32>
    %cst_8 = arith.constant dense<0.000000e+00> : vector<128x256xf32>
    %9 = tpu.matmul %7, %8, %cst_8 {dimension_numbers = #tpu.dot_dimension_numbers<[1], [0], [0], [1], [0, 0, 1, 1], [], []>} : vector<128x256xf32>, vector<256x256xf32>, vector<128x256xf32> -> vector<128x256xf32>
    %c0_9 = arith.constant 0 : index
    %c0_10 = arith.constant 0 : index
    %10 = vector.load %arg5[%c0_9, %c0_10] : memref<1x256xf32, #tpu.memory_space<vmem>>, vector<1x256xf32>
    %11 = vector.broadcast %10 : vector<1x256xf32> to vector<128x256xf32>
    %12 = arith.addf %9, %11 : vector<128x256xf32>
    %cst_11 = arith.constant 0.000000e+00 : f32
    %13 = vector.broadcast %cst_11 : f32 to vector<128x256xf32>
    %14 = arith.maximumf %12, %13 : vector<128x256xf32>
    %15 = vector.shape_cast %14 : vector<128x256xf32> to vector<1x128x256xf32>
    %c0_12 = arith.constant 0 : index
    %c0_13 = arith.constant 0 : index
    %16 = vector.load %arg6[%c0_12, %c0_13] : memref<1x256xf32, #tpu.memory_space<vmem>>, vector<1x256xf32>
    %17 = vector.shape_cast %16 : vector<1x256xf32> to vector<1x1x256xf32>
    %18 = vector.broadcast %17 : vector<1x1x256xf32> to vector<1x128x256xf32>
    %19 = arith.mulf %15, %18 : vector<1x128x256xf32>
    %cst_14 = arith.constant dense<0.000000e+00> : vector<1x128xf32>
    %20 = vector.multi_reduction <add>, %19, %cst_14 [2] : vector<1x128x256xf32> to vector<1x128xf32>
    %c0_15 = arith.constant 0 : index
    %c0_16 = arith.constant 0 : index
    %21 = vector.load %arg7[%c0_15, %c0_16] : memref<1x1xf32, #tpu.memory_space<vmem>>, vector<1x1xf32>
    %22 = vector.broadcast %21 : vector<1x1xf32> to vector<1x128xf32>
    %23 = arith.addf %20, %22 : vector<1x128xf32>
    %24 = arith.negf %23 : vector<1x128xf32>
    %25 = math.exp %24 : vector<1x128xf32>
    %cst_17 = arith.constant 1.000000e+00 : f32
    %26 = vector.broadcast %cst_17 : f32 to vector<1x128xf32>
    %27 = arith.addf %26, %25 : vector<1x128xf32>
    %28 = arith.divf %26, %27 : vector<1x128xf32>
    %c0_18 = arith.constant 0 : index
    %c0_19 = arith.constant 0 : index
    %c0_20 = arith.constant 0 : index
    %29 = vector.load %arg8[%c0_18, %c0_19, %c0_20] : memref<1x1x128xf32, #tpu.memory_space<vmem>>, vector<1x1x128xf32>
    %30 = vector.shape_cast %29 : vector<1x1x128xf32> to vector<1x128xf32>
    %31 = vector.shape_cast %28 : vector<1x128xf32> to vector<1x1x128xf32>
    tpu.vector_store %arg8[%c0_18, %c0_19, %c0_20], %31 {strides = array<i32>} : memref<1x1x128xf32, #tpu.memory_space<vmem>>, vector<1x1x128xf32>,
    return
  }
  func.func @transform_0(%arg0: i32) -> (i32, i32) {
    %c0_i32 = arith.constant 0 : i32
    %c0_i32_0 = arith.constant 0 : i32
    return %arg0, %c0_i32 : i32, i32
  }
  func.func @transform_1(%arg0: i32) -> (i32, i32) {
    %c0_i32 = arith.constant 0 : i32
    %c0_i32_0 = arith.constant 0 : i32
    %c0_i32_1 = arith.constant 0 : i32
    return %c0_i32, %c0_i32_0 : i32, i32
  }
  func.func @transform_2(%arg0: i32) -> (i32, i32) {
    %c0_i32 = arith.constant 0 : i32
    %c0_i32_0 = arith.constant 0 : i32
    %c0_i32_1 = arith.constant 0 : i32
    return %c0_i32, %c0_i32_0 : i32, i32
  }
  func.func @transform_3(%arg0: i32) -> (i32, i32) {
    %c0_i32 = arith.constant 0 : i32
    %c0_i32_0 = arith.constant 0 : i32
    %c0_i32_1 = arith.constant 0 : i32
    return %c0_i32, %c0_i32_0 : i32, i32
  }
  func.func @transform_4(%arg0: i32) -> (i32, i32) {
    %c0_i32 = arith.constant 0 : i32
    %c0_i32_0 = arith.constant 0 : i32
    %c0_i32_1 = arith.constant 0 : i32
    return %c0_i32, %c0_i32_0 : i32, i32
  }
  func.func @transform_5(%arg0: i32) -> (i32, i32) {
    %c0_i32 = arith.constant 0 : i32
    %c0_i32_0 = arith.constant 0 : i32
    %c0_i32_1 = arith.constant 0 : i32
    return %c0_i32, %c0_i32_0 : i32, i32
  }
  func.func @transform_6(%arg0: i32) -> (i32, i32) {
    %c0_i32 = arith.constant 0 : i32
    %c0_i32_0 = arith.constant 0 : i32
    %c0_i32_1 = arith.constant 0 : i32
    return %c0_i32, %c0_i32_0 : i32, i32
  }
  func.func @transform_7(%arg0: i32) -> (i32, i32, i32) {
    %c0_i32 = arith.constant 0 : i32
    %c0_i32_0 = arith.constant 0 : i32
    %c0_i32_1 = arith.constant 0 : i32
    return %arg0, %c0_i32, %c0_i32_0 : i32, i32, i32
  }
}

</mosaic_0001>

<llo_original>
// kernel: tpu_custom_call.1
$region0: #{tpu_custom_call.1}
  #allocation0 [shape = 'u32[]', space=smem, size = 0x4, offset = 0x4, fixed_abs, tag = 'smem constant byte address 0x4 - core index']
  #allocation1 [shape = 'u32[144,128]{1,0:T(1,128)}', space=vmem, size = 0x12000, scoped, tag = 'internal scratch']
  #allocation2 [shape = 'f32[1,1]{1,0:T(1,128)S(1)}', space=vmem, size = 0x200, scoped, tag = 'scoped memory for tpu_custom_call.1']
  %s0 = inlined_call_operand.vmem [shape: f32[128,32], index: 0, kind: input, shape index: {}]
  %s1 = inlined_call_operand.vmem [shape: f32[32,256], index: 1, kind: input, shape index: {}]
  %s2 = inlined_call_operand.vmem [shape: f32[1,256], index: 2, kind: input, shape index: {}]
  %s3 = inlined_call_operand.hbm [shape: f32[256,256], index: 3, kind: input, shape index: {}]
  %s4 = inlined_call_operand.vmem [shape: f32[1,256], index: 4, kind: input, shape index: {}]
  %s5 = inlined_call_operand.vmem [shape: f32[1,256], index: 5, kind: input, shape index: {}]
  %s6 = inlined_call_operand.<no memory space> [shape: f32[1,1], index: 6, kind: input, shape index: {}]
  %s7 = inlined_call_operand.hbm [shape: f32[1,1,128], index: 7, kind: output, shape index: {}]
  %s8 = sld [smem:[#allocation0]]
  $region42: #{tpu_custom_call.1} parent=0
    _
  %s10 = ssub.s32 1, %s8
  %s11 = scalar_select 0, %s10, %s8
  %v12 = vstv %s6
  %13 = vst [vmem:[#allocation2] sm:$0x1] %v12
  $region1: #{tpu_custom_call.1} parent=0
    #allocation3 [shape = 'u8[262144]{0}', space=vmem, size = 0x40000, scoped, tag = 'input window, operand 3, single buffered']
    #allocation4 [shape = 's32[1]{0}', space=sflag, size = 0x4, scoped, tag = 'scoped memory for tpu_custom_call.1']
    #allocation5 [shape = 's32[1]{0}', space=sflag, size = 0x4, scoped, tag = 'scoped memory for tpu_custom_call.1']
    #allocation6 [shape = 'u8[512]{0}', space=vmem, size = 0x400, scoped, tag = 'output window, operand 0, single buffered']
    %14 = vsyncpa [#allocation4], 0
    %15 = vsyncpa [#allocation5], 0
    // Predicated region
    $region2: #{tpu_custom_call.1} parent=1 // pred_check
      _
    $region3: #{tpu_custom_call.1} parent=1 // pred_check_branch
      %17 = sbr.rel (0) target = $region5
    $region4: #{tpu_custom_call.1} parent=1 // pred_region
      _
    $region5: #{tpu_custom_call.1} parent=1 // pred_fallthru
      _
    // Predicated region
    $region6: #{tpu_custom_call.1} parent=1 // pred_check
      _
    $region7: #{tpu_custom_call.1} parent=1 // pred_check_branch
      %19 = sbr.rel (0) target = $region9
    $region8: #{tpu_custom_call.1} parent=1 // pred_region
      _
    $region9: #{tpu_custom_call.1} parent=1 // pred_fallthru
      _
    // Predicated region
    $region10: #{tpu_custom_call.1} parent=1 // pred_check
      _
    $region11: #{tpu_custom_call.1} parent=1 // pred_check_branch
      %21 = sbr.rel (0) target = $region13
    $region12: #{tpu_custom_call.1} parent=1 // pred_region
      _
    $region13: #{tpu_custom_call.1} parent=1 // pred_fallthru
      _
    // Predicated region
    $region14: #{tpu_custom_call.1} parent=1 // pred_check
      _
    $region15: #{tpu_custom_call.1} parent=1 // pred_check_branch
      %23 = sbr.rel (0) target = $region17
    $region16: #{tpu_custom_call.1} parent=1 // pred_region
      %s25 = ssub.s32 8192, 8192
      %26 = vsyncadd [#allocation4], %s25
      %s27 = sshll.u32 [#allocation3], 4
      %s28 = int_to_ptr.vmem [resolvable:$true] %s27
      %33 = dma.hbm_to_vmem [thread:$0]  %s3, 8192, %s28, [#allocation4], 256, 256, 16
    $region17: #{tpu_custom_call.1} parent=1 // pred_fallthru
      _
    // Predicated region
    $region18: #{tpu_custom_call.1} parent=1 // pred_check
      _
    $region19: #{tpu_custom_call.1} parent=1 // pred_check_branch
      %35 = sbr.rel (0) target = $region21
    $region20: #{tpu_custom_call.1} parent=1 // pred_region
      _
    $region21: #{tpu_custom_call.1} parent=1 // pred_fallthru
      _
    // Predicated region
    $region22: #{tpu_custom_call.1} parent=1 // pred_check
      _
    $region23: #{tpu_custom_call.1} parent=1 // pred_check_branch
      %37 = sbr.rel (0) target = $region25
    $region24: #{tpu_custom_call.1} parent=1 // pred_region
      _
    $region25: #{tpu_custom_call.1} parent=1 // pred_fallthru
      _
    // Predicated region
    $region26: #{tpu_custom_call.1} parent=1 // pred_check
      _
    $region27: #{tpu_custom_call.1} parent=1 // pred_check_branch
      %39 = sbr.rel (0) target = $region29
    $region28: #{tpu_custom_call.1} parent=1 // pred_region
      _
    $region29: #{tpu_custom_call.1} parent=1 // pred_fallthru
      _
    // Predicated region
    $region30: #{tpu_custom_call.1} parent=1 // pred_check
      _
    $region31: #{tpu_custom_call.1} parent=1 // pred_check_branch
      %41 = sbr.rel (0) target = $region33
    $region32: #{tpu_custom_call.1} parent=1 // pred_region
      %42 = dma.done [#allocation4], 8192
    $region33: #{tpu_custom_call.1} parent=1 // pred_fallthru
      _
    %v43 = vld [vmem:[%s0] sm:$0xff]
    %v44 = vld [vmem:[%s0 + $0x8] sm:$0xff]
    %v45 = vld [vmem:[%s0 + $0x10] sm:$0xff]
    %v46 = vld [vmem:[%s0 + $0x18] sm:$0xff]
    %v47 = vld [vmem:[%s0 + $0x20] sm:$0xff]
    %v48 = vld [vmem:[%s0 + $0x28] sm:$0xff]
    %v49 = vld [vmem:[%s0 + $0x30] sm:$0xff]
    %v50 = vld [vmem:[%s0 + $0x38] sm:$0xff]
    %v51 = vld [vmem:[%s0 + $0x40] sm:$0xff]
    %v52 = vld [vmem:[%s0 + $0x48] sm:$0xff]
    %v53 = vld [vmem:[%s0 + $0x50] sm:$0xff]
    %v54 = vld [vmem:[%s0 + $0x58] sm:$0xff]
    %v55 = vld [vmem:[%s0 + $0x60] sm:$0xff]
    %v56 = vld [vmem:[%s0 + $0x68] sm:$0xff]
    %v57 = vld [vmem:[%s0 + $0x70] sm:$0xff]
    %v58 = vld [vmem:[%s0 + $0x78] sm:$0xff]
    %v59 = vld [vmem:[%s1] sm:$0xff]
    %v60 = vld [vmem:[%s1 + $0x8] sm:$0xff]
    %v61 = vld [vmem:[%s1 + $0x10] sm:$0xff]
    %v62 = vld [vmem:[%s1 + $0x18] sm:$0xff]
    %v63 = vld [vmem:[%s1 + $0x20] sm:$0xff]
    %v64 = vld [vmem:[%s1 + $0x28] sm:$0xff]
    %v65 = vld [vmem:[%s1 + $0x30] sm:$0xff]
    %v66 = vld [vmem:[%s1 + $0x38] sm:$0xff]
    %v67 = vld [vmem:[%s2] sm:$0x3]
    %v69 = vlaneseq
    %v70 = vshrl.u32 %v69, 7
    %v71 = vsub.s32 0, %v70
    %v72 = vrot.slane %v67, %v71
    %v73 = vlaneseq
    %v74 = vshrl.u32 %v73, 7
    %v75 = vsub.s32 1, %v74
    %v76 = vrot.slane %v67, %v75
    %vm79 = vcmask 261120
    %v81 = vsel %vm79, %v43, 0
    %v84 = vsel %vm79, %v44, 0
    %v87 = vsel %vm79, %v45, 0
    %v90 = vsel %vm79, %v46, 0
    %v93 = vsel %vm79, %v47, 0
    %v96 = vsel %vm79, %v48, 0
    %v99 = vsel %vm79, %v49, 0
    %v102 = vsel %vm79, %v50, 0
    %v105 = vsel %vm79, %v51, 0
    %v108 = vsel %vm79, %v52, 0
    %v111 = vsel %vm79, %v53, 0
    %v114 = vsel %vm79, %v54, 0
    %v117 = vsel %vm79, %v55, 0
    %v120 = vsel %vm79, %v56, 0
    %v123 = vsel %vm79, %v57, 0
    %v126 = vsel %vm79, %v58, 0
    %128 = vmatprep.subr.mxu0 %v60
    %129 = vmatpush1.msra.mxu0 %v59
    %130 = vmatprep.subr.mxu0 %v62
    %131 = vmatpush1.msra.mxu0 %v61
    %132 = vmatprep.subr.mxu0 %v64
    %133 = vmatpush1.msra.mxu0 %v63
    %134 = vmatprep.subr.mxu0 %v66
    %135 = vmatpush1.msra.mxu0 %v65
    %136 = vmatprep.subr.mxu0 0.0
    %137 = vmatpush1.msra.mxu0 0.0
    %138 = vmatprep.subr.mxu0 0.0
    %139 = vmatpush1.msra.mxu0 0.0
    %140 = vmatprep.subr.mxu0 0.0
    %141 = vmatpush1.msra.mxu0 0.0
    %142 = vmatprep.subr.mxu0 0.0
    %143 = vmatpush1.msra.mxu0 0.0
    %144 = vmatprep.subr.mxu0 0.0
    %145 = vmatpush1.msra.mxu0 0.0
    %146 = vmatprep.subr.mxu0 0.0
    %147 = vmatpush1.msra.mxu0 0.0
    %148 = vmatprep.subr.mxu0 0.0
    %149 = vmatpush1.msra.mxu0 0.0
    %150 = vmatprep.subr.mxu0 0.0
    %151 = vmatpush1.msra.mxu0 0.0
    %152 = vmatprep.subr.mxu0 0.0
    %153 = vmatpush1.msra.mxu0 0.0
    %154 = vmatprep.subr.mxu0 0.0
    %155 = vmatpush1.msra.mxu0 0.0
    %156 = vmatprep.subr.mxu0 0.0
    %157 = vmatpush1.msra.mxu0 0.0
    %158 = vmatprep.subr.mxu0 0.0
    %159 = vmatpush1.msra.mxu0 0.0
    %160 = vmatprep.subr.mxu0 0.0
    %161 = vmatpush1.msra.mxu0 0.0
    %162 = vmatprep.subr.mxu0 0.0
    %163 = vmatpush1.msra.mxu0 0.0
    %164 = vmatprep.subr.mxu0 0.0
    %165 = vmatpush1.msra.mxu0 0.0
    %166 = vmatprep.subr.mxu0 0.0
    %167 = vmatpush1.msra.mxu0 0.0
    %168 = vmatprep.subr.mxu0 0.0
    %169 = vmatpush1.msra.mxu0 0.0
    %170 = vmatprep.subr.mxu0 0.0
    %171 = vmatpush1.msra.mxu0 0.0
    %172 = vmatprep.subr.mxu0 0.0
    %173 = vmatpush1.msra.mxu0 0.0
    %174 = vmatprep.subr.mxu0 0.0
    %175 = vmatpush1.msra.mxu0 0.0
    %176 = vmatprep.subr.mxu0 0.0
    %177 = vmatpush1.msra.mxu0 0.0
    %178 = vmatprep.subr.mxu0 0.0
    %179 = vmatpush1.msra.mxu0 0.0
    %180 = vmatprep.subr.mxu0 0.0
    %181 = vmatpush1.msra.mxu0 0.0
    %182 = vmatprep.subr.mxu0 0.0
    %183 = vmatpush1.msra.mxu0 0.0
    %184 = vmatprep.subr.mxu0 0.0
    %185 = vmatpush1.msra.mxu0 0.0
    %186 = vmatprep.subr.mxu0 0.0
    %187 = vmatpush1.msra.mxu0 0.0
    %188 = vmatprep.subr.mxu0 0.0
    %189 = vmatpush1.msra.mxu0 0.0
    %190 = vmatprep.subr.mxu0 0.0
    %191 = vmatpush1.msra.mxu0 0.0
    %192 = vmatprep.mubr.f32.mxu0 0.0
    %193 = vmatmul.mubr.f32.gmra.mrb[0].mxu0 %v81
    %v194 = vpop.f32.mrb[0].mxu0
    %v195 = vadd.f32 %v72, %v194
    %v196 = vpop.f32.mrb[0].mxu0
    %v197 = vadd.f32 %v76, %v196
    %198 = vmatprep.mubr.f32.mxu0 0.0
    %199 = vmatmul.mubr.f32.gmra.mrb[0].mxu0 %v84
    %v200 = vpop.f32.mrb[0].mxu0
    %v201 = vadd.f32 %v72, %v200
    %v202 = vpop.f32.mrb[0].mxu0
    %v203 = vadd.f32 %v76, %v202
    %204 = vmatprep.mubr.f32.mxu0 0.0
    %205 = vmatmul.mubr.f32.gmra.mrb[0].mxu0 %v87
    %v206 = vpop.f32.mrb[0].mxu0
    %v207 = vadd.f32 %v72, %v206
    %v208 = vpop.f32.mrb[0].mxu0
    %v209 = vadd.f32 %v76, %v208
    %210 = vmatprep.mubr.f32.mxu0 0.0
    %211 = vmatmul.mubr.f32.gmra.mrb[0].mxu0 %v90
    %v212 = vpop.f32.mrb[0].mxu0
    %v213 = vadd.f32 %v72, %v212
    %v214 = vpop.f32.mrb[0].mxu0
    %v215 = vadd.f32 %v76, %v214
    %216 = vmatprep.mubr.f32.mxu0 0.0
    %217 = vmatmul.mubr.f32.gmra.mrb[0].mxu0 %v93
    %v218 = vpop.f32.mrb[0].mxu0
    %v219 = vadd.f32 %v72, %v218
    %v220 = vpop.f32.mrb[0].mxu0
    %v221 = vadd.f32 %v76, %v220
    %222 = vmatprep.mubr.f32.mxu0 0.0
    %223 = vmatmul.mubr.f32.gmra.mrb[0].mxu0 %v96
    %v224 = vpop.f32.mrb[0].mxu0
    %v225 = vadd.f32 %v72, %v224
    %v226 = vpop.f32.mrb[0].mxu0
    %v227 = vadd.f32 %v76, %v226
    %228 = vmatprep.mubr.f32.mxu0 0.0
    %229 = vmatmul.mubr.f32.gmra.mrb[0].mxu0 %v99
    %v230 = vpop.f32.mrb[0].mxu0
    %v231 = vadd.f32 %v72, %v230
    %v232 = vpop.f32.mrb[0].mxu0
    %v233 = vadd.f32 %v76, %v232
    %234 = vmatprep.mubr.f32.mxu0 0.0
    %235 = vmatmul.mubr.f32.gmra.mrb[0].mxu0 %v102
    %v236 = vpop.f32.mrb[0].mxu0
    %v237 = vadd.f32 %v72, %v236
    %v238 = vpop.f32.mrb[0].mxu0
    %v239 = vadd.f32 %v76, %v238
    %240 = vmatprep.mubr.f32.mxu0 0.0
    %241 = vmatmul.mubr.f32.gmra.mrb[0].mxu0 %v105
    %v242 = vpop.f32.mrb[0].mxu0
    %v243 = vadd.f32 %v72, %v242
    %v244 = vpop.f32.mrb[0].mxu0
    %v245 = vadd.f32 %v76, %v244
    %246 = vmatprep.mubr.f32.mxu0 0.0
    %247 = vmatmul.mubr.f32.gmra.mrb[0].mxu0 %v108
    %v248 = vpop.f32.mrb[0].mxu0
    %v249 = vadd.f32 %v72, %v248
    %v250 = vpop.f32.mrb[0].mxu0
    %v251 = vadd.f32 %v76, %v250
    %252 = vmatprep.mubr.f32.mxu0 0.0
    %253 = vmatmul.mubr.f32.gmra.mrb[0].mxu0 %v111
    %v254 = vpop.f32.mrb[0].mxu0
    %v255 = vadd.f32 %v72, %v254
    %v256 = vpop.f32.mrb[0].mxu0
    %v257 = vadd.f32 %v76, %v256
    %258 = vmatprep.mubr.f32.mxu0 0.0
    %259 = vmatmul.mubr.f32.gmra.mrb[0].mxu0 %v114
    %v260 = vpop.f32.mrb[0].mxu0
    %v261 = vadd.f32 %v72, %v260
    %v262 = vpop.f32.mrb[0].mxu0
    %v263 = vadd.f32 %v76, %v262
    %264 = vmatprep.mubr.f32.mxu0 0.0
    %265 = vmatmul.mubr.f32.gmra.mrb[0].mxu0 %v117
    %v266 = vpop.f32.mrb[0].mxu0
    %v267 = vadd.f32 %v72, %v266
    %v268 = vpop.f32.mrb[0].mxu0
    %v269 = vadd.f32 %v76, %v268
    %270 = vmatprep.mubr.f32.mxu0 0.0
    %271 = vmatmul.mubr.f32.gmra.mrb[0].mxu0 %v120
    %v272 = vpop.f32.mrb[0].mxu0
    %v273 = vadd.f32 %v72, %v272
    %v274 = vpop.f32.mrb[0].mxu0
    %v275 = vadd.f32 %v76, %v274
    %276 = vmatprep.mubr.f32.mxu0 0.0
    %277 = vmatmul.mubr.f32.gmra.mrb[0].mxu0 %v123
    %v278 = vpop.f32.mrb[0].mxu0
    %v279 = vadd.f32 %v72, %v278
    %v280 = vpop.f32.mrb[0].mxu0
    %v281 = vadd.f32 %v76, %v280
    %282 = vmatprep.mubr.f32.mxu0 0.0
    %283 = vmatmul.mubr.f32.gmra.mrb[0].mxu0 %v126
    %v284 = vpop.f32.mrb[0].mxu0
    %v285 = vadd.f32 %v72, %v284
    %v286 = vpop.f32.mrb[0].mxu0
    %v287 = vadd.f32 %v76, %v286
    %288 = vdwg.mxu0
    %v289 = vmax.f32 %v195, 0.0
    %v290 = vmax.f32 %v197, 0.0
    %v291 = vmax.f32 %v201, 0.0
    %v292 = vmax.f32 %v203, 0.0
    %v293 = vmax.f32 %v207, 0.0
    %v294 = vmax.f32 %v209, 0.0
    %v295 = vmax.f32 %v213, 0.0
    %v296 = vmax.f32 %v215, 0.0
    %v297 = vmax.f32 %v219, 0.0
    %v298 = vmax.f32 %v221, 0.0
    %v299 = vmax.f32 %v225, 0.0
    %v300 = vmax.f32 %v227, 0.0
    %v301 = vmax.f32 %v231, 0.0
    %v302 = vmax.f32 %v233, 0.0
    %v303 = vmax.f32 %v237, 0.0
    %v304 = vmax.f32 %v239, 0.0
    %v305 = vmax.f32 %v243, 0.0
    %v306 = vmax.f32 %v245, 0.0
    %v307 = vmax.f32 %v249, 0.0
    %v308 = vmax.f32 %v251, 0.0
    %v309 = vmax.f32 %v255, 0.0
    %v310 = vmax.f32 %v257, 0.0
    %v311 = vmax.f32 %v261, 0.0
    %v312 = vmax.f32 %v263, 0.0
    %v313 = vmax.f32 %v267, 0.0
    %v314 = vmax.f32 %v269, 0.0
    %v315 = vmax.f32 %v273, 0.0
    %v316 = vmax.f32 %v275, 0.0
    %v317 = vmax.f32 %v279, 0.0
    %v318 = vmax.f32 %v281, 0.0
    %v319 = vmax.f32 %v285, 0.0
    %v320 = vmax.f32 %v287, 0.0
    %v321 = vld [vmem:[#allocation3] sm:$0xff]
    %v322 = vld [vmem:[#allocation3 + $0x8] sm:$0xff]
    %v323 = vld [vmem:[#allocation3 + $0x10] sm:$0xff]
    %v324 = vld [vmem:[#allocation3 + $0x18] sm:$0xff]
    %v325 = vld [vmem:[#allocation3 + $0x20] sm:$0xff]
    %v326 = vld [vmem:[#allocation3 + $0x28] sm:$0xff]
    %v327 = vld [vmem:[#allocation3 + $0x30] sm:$0xff]
    %v328 = vld [vmem:[#allocation3 + $0x38] sm:$0xff]
    %v329 = vld [vmem:[#allocation3 + $0x40] sm:$0xff]
    %v330 = vld [vmem:[#allocation3 + $0x48] sm:$0xff]
    %v331 = vld [vmem:[#allocation3 + $0x50] sm:$0xff]
    %v332 = vld [vmem:[#allocation3 + $0x58] sm:$0xff]
    %v333 = vld [vmem:[#allocation3 + $0x60] sm:$0xff]
    %v334 = vld [vmem:[#allocation3 + $0x68] sm:$0xff]
    %v335 = vld [vmem:[#allocation3 + $0x70] sm:$0xff]
    %v336 = vld [vmem:[#allocation3 + $0x78] sm:$0xff]
    %v337 = vld [vmem:[#allocation3 + $0x80] sm:$0xff]
    %v338 = vld [vmem:[#allocation3 + $0x88] sm:$0xff]
    %v339 = vld [vmem:[#allocation3 + $0x90] sm:$0xff]
    %v340 = vld [vmem:[#allocation3 + $0x98] sm:$0xff]
    %v341 = vld [vmem:[#allocation3 + $0xa0] sm:$0xff]
    %v342 = vld [vmem:[#allocation3 + $0xa8] sm:$0xff]
    %v343 = vld [vmem:[#allocation3 + $0xb0] sm:$0xff]
    %v344 = vld [vmem:[#allocation3 + $0xb8] sm:$0xff]
    %v345 = vld [vmem:[#allocation3 + $0xc0] sm:$0xff]
    %v346 = vld [vmem:[#allocation3 + $0xc8] sm:$0xff]
    %v347 = vld [vmem:[#allocation3 + $0xd0] sm:$0xff]
    %v348 = vld [vmem:[#allocation3 + $0xd8] sm:$0xff]
    %v349 = vld [vmem:[#allocation3 + $0xe0] sm:$0xff]
    %v350 = vld [vmem:[#allocation3 + $0xe8] sm:$0xff]
    %v351 = vld [vmem:[#allocation3 + $0xf0] sm:$0xff]
    %v352 = vld [vmem:[#allocation3 + $0xf8] sm:$0xff]
    %v353 = vld [vmem:[#allocation3 + $0x100] sm:$0xff]
    %v354 = vld [vmem:[#allocation3 + $0x108] sm:$0xff]
    %v355 = vld [vmem:[#allocation3 + $0x110] sm:$0xff]
    %v356 = vld [vmem:[#allocation3 + $0x118] sm:$0xff]
    %v357 = vld [vmem:[#allocation3 + $0x120] sm:$0xff]
    %v358 = vld [vmem:[#allocation3 + $0x128] sm:$0xff]
    %v359 = vld [vmem:[#allocation3 + $0x130] sm:$0xff]
    %v360 = vld [vmem:[#allocation3 + $0x138] sm:$0xff]
    %v361 = vld [vmem:[#allocation3 + $0x140] sm:$0xff]
    %v362 = vld [vmem:[#allocation3 + $0x148] sm:$0xff]
    %v363 = vld [vmem:[#allocation3 + $0x150] sm:$0xff]
    %v364 = vld [vmem:[#allocation3 + $0x158] sm:$0xff]
    %v365 = vld [vmem:[#allocation3 + $0x160] sm:$0xff]
    %v366 = vld [vmem:[#allocation3 + $0x168] sm:$0xff]
    %v367 = vld [vmem:[#allocation3 + $0x170] sm:$0xff]
    %v368 = vld [vmem:[#allocation3 + $0x178] sm:$0xff]
    %v369 = vld [vmem:[#allocation3 + $0x180] sm:$0xff]
    %v370 = vld [vmem:[#allocation3 + $0x188] sm:$0xff]
    %v371 = vld [vmem:[#allocation3 + $0x190] sm:$0xff]
    %v372 = vld [vmem:[#allocation3 + $0x198] sm:$0xff]
    %v373 = vld [vmem:[#allocation3 + $0x1a0] sm:$0xff]
    %v374 = vld [vmem:[#allocation3 + $0x1a8] sm:$0xff]
    %v375 = vld [vmem:[#allocation3 + $0x1b0] sm:$0xff]
    %v376 = vld [vmem:[#allocation3 + $0x1b8] sm:$0xff]
    %v377 = vld [vmem:[#allocation3 + $0x1c0] sm:$0xff]
    %v378 = vld [vmem:[#allocation3 + $0x1c8] sm:$0xff]
    %v379 = vld [vmem:[#allocation3 + $0x1d0] sm:$0xff]
    %v380 = vld [vmem:[#allocation3 + $0x1d8] sm:$0xff]
    %v381 = vld [vmem:[#allocation3 + $0x1e0] sm:$0xff]
    %v382 = vld [vmem:[#allocation3 + $0x1e8] sm:$0xff]
    %v383 = vld [vmem:[#allocation3 + $0x1f0] sm:$0xff]
    %v384 = vld [vmem:[#allocation3 + $0x1f8] sm:$0xff]
    %v385 = vld [vmem:[%s4] sm:$0x3]
    %v387 = vlaneseq
    %v388 = vshrl.u32 %v387, 7
    %v389 = vsub.s32 0, %v388
    %v390 = vrot.slane %v385, %v389
    %v391 = vlaneseq
    %v392 = vshrl.u32 %v391, 7
    %v393 = vsub.s32 1, %v392
    %v394 = vrot.slane %v385, %v393
    %397 = vmatprep.subr.mxu0 %v322
    %398 = vmatpush1.msra.mxu0 %v321
    %399 = vmatprep.subr.mxu0 %v324
    %400 = vmatpush1.msra.mxu0 %v323
    %401 = vmatprep.subr.mxu0 %v326
    %402 = vmatpush1.msra.mxu0 %v325
    %403 = vmatprep.subr.mxu0 %v328
    %404 = vmatpush1.msra.mxu0 %v327
    %405 = vmatprep.subr.mxu0 %v330
    %406 = vmatpush1.msra.mxu0 %v329
    %407 = vmatprep.subr.mxu0 %v332
    %408 = vmatpush1.msra.mxu0 %v331
    %409 = vmatprep.subr.mxu0 %v334
    %410 = vmatpush1.msra.mxu0 %v333
    %411 = vmatprep.subr.mxu0 %v336
    %412 = vmatpush1.msra.mxu0 %v335
    %413 = vmatprep.subr.mxu0 %v338
    %414 = vmatpush1.msra.mxu0 %v337
    %415 = vmatprep.subr.mxu0 %v340
    %416 = vmatpush1.msra.mxu0 %v339
    %417 = vmatprep.subr.mxu0 %v342
    %418 = vmatpush1.msra.mxu0 %v341
    %419 = vmatprep.subr.mxu0 %v344
    %420 = vmatpush1.msra.mxu0 %v343
    %421 = vmatprep.subr.mxu0 %v346
    %422 = vmatpush1.msra.mxu0 %v345
    %423 = vmatprep.subr.mxu0 %v348
    %424 = vmatpush1.msra.mxu0 %v347
    %425 = vmatprep.subr.mxu0 %v350
    %426 = vmatpush1.msra.mxu0 %v349
    %427 = vmatprep.subr.mxu0 %v352
    %428 = vmatpush1.msra.mxu0 %v351
    %429 = vmatprep.subr.mxu0 %v354
    %430 = vmatpush1.msra.mxu0 %v353
    %431 = vmatprep.subr.mxu0 %v356
    %432 = vmatpush1.msra.mxu0 %v355
    %433 = vmatprep.subr.mxu0 %v358
    %434 = vmatpush1.msra.mxu0 %v357
    %435 = vmatprep.subr.mxu0 %v360
    %436 = vmatpush1.msra.mxu0 %v359
    %437 = vmatprep.subr.mxu0 %v362
    %438 = vmatpush1.msra.mxu0 %v361
    %439 = vmatprep.subr.mxu0 %v364
    %440 = vmatpush1.msra.mxu0 %v363
    %441 = vmatprep.subr.mxu0 %v366
    %442 = vmatpush1.msra.mxu0 %v365
    %443 = vmatprep.subr.mxu0 %v368
    %444 = vmatpush1.msra.mxu0 %v367
    %445 = vmatprep.subr.mxu0 %v370
    %446 = vmatpush1.msra.mxu0 %v369
    %447 = vmatprep.subr.mxu0 %v372
    %448 = vmatpush1.msra.mxu0 %v371
    %449 = vmatprep.subr.mxu0 %v374
    %450 = vmatpush1.msra.mxu0 %v373
    %451 = vmatprep.subr.mxu0 %v376
    %452 = vmatpush1.msra.mxu0 %v375
    %453 = vmatprep.subr.mxu0 %v378
    %454 = vmatpush1.msra.mxu0 %v377
    %455 = vmatprep.subr.mxu0 %v380
    %456 = vmatpush1.msra.mxu0 %v379
    %457 = vmatprep.subr.mxu0 %v382
    %458 = vmatpush1.msra.mxu0 %v381
    %459 = vmatprep.subr.mxu0 %v384
    %460 = vmatpush1.msra.mxu0 %v383
    %461 = vmatprep.mubr.f32.mxu0 %v290
    %462 = vmatmul.mubr.f32.gmra.mrb[0].mxu0 %v289
    %v463 = vpop.f32.mrb[0].mxu0
    %v464 = vadd.f32 %v390, %v463
    %v465 = vpop.f32.mrb[0].mxu0
    %v466 = vadd.f32 %v394, %v465
    %467 = vmatprep.mubr.f32.mxu0 %v292
    %468 = vmatmul.mubr.f32.gmra.mrb[0].mxu0 %v291
    %v469 = vpop.f32.mrb[0].mxu0
    %v470 = vadd.f32 %v390, %v469
    %v471 = vpop.f32.mrb[0].mxu0
    %v472 = vadd.f32 %v394, %v471
    %473 = vmatprep.mubr.f32.mxu0 %v294
    %474 = vmatmul.mubr.f32.gmra.mrb[0].mxu0 %v293
    %v475 = vpop.f32.mrb[0].mxu0
    %v476 = vadd.f32 %v390, %v475
    %v477 = vpop.f32.mrb[0].mxu0
    %v478 = vadd.f32 %v394, %v477
    %479 = vmatprep.mubr.f32.mxu0 %v296
    %480 = vmatmul.mubr.f32.gmra.mrb[0].mxu0 %v295
    %v481 = vpop.f32.mrb[0].mxu0
    %v482 = vadd.f32 %v390, %v481
    %v483 = vpop.f32.mrb[0].mxu0
    %v484 = vadd.f32 %v394, %v483
    %485 = vmatprep.mubr.f32.mxu0 %v298
    %486 = vmatmul.mubr.f32.gmra.mrb[0].mxu0 %v297
    %v487 = vpop.f32.mrb[0].mxu0
    %v488 = vadd.f32 %v390, %v487
    %v489 = vpop.f32.mrb[0].mxu0
    %v490 = vadd.f32 %v394, %v489
    %491 = vmatprep.mubr.f32.mxu0 %v300
    %492 = vmatmul.mubr.f32.gmra.mrb[0].mxu0 %v299
    %v493 = vpop.f32.mrb[0].mxu0
    %v494 = vadd.f32 %v390, %v493
    %v495 = vpop.f32.mrb[0].mxu0
    %v496 = vadd.f32 %v394, %v495
    %497 = vmatprep.mubr.f32.mxu0 %v302
    %498 = vmatmul.mubr.f32.gmra.mrb[0].mxu0 %v301
    %v499 = vpop.f32.mrb[0].mxu0
    %v500 = vadd.f32 %v390, %v499
    %v501 = vpop.f32.mrb[0].mxu0
    %v502 = vadd.f32 %v394, %v501
    %503 = vmatprep.mubr.f32.mxu0 %v304
    %504 = vmatmul.mubr.f32.gmra.mrb[0].mxu0 %v303
    %v505 = vpop.f32.mrb[0].mxu0
    %v506 = vadd.f32 %v390, %v505
    %v507 = vpop.f32.mrb[0].mxu0
    %v508 = vadd.f32 %v394, %v507
    %509 = vmatprep.mubr.f32.mxu0 %v306
    %510 = vmatmul.mubr.f32.gmra.mrb[0].mxu0 %v305
    %v511 = vpop.f32.mrb[0].mxu0
    %v512 = vadd.f32 %v390, %v511
    %v513 = vpop.f32.mrb[0].mxu0
    %v514 = vadd.f32 %v394, %v513
    %515 = vmatprep.mubr.f32.mxu0 %v308
    %516 = vmatmul.mubr.f32.gmra.mrb[0].mxu0 %v307
    %v517 = vpop.f32.mrb[0].mxu0
    %v518 = vadd.f32 %v390, %v517
    %v519 = vpop.f32.mrb[0].mxu0
    %v520 = vadd.f32 %v394, %v519
    %521 = vmatprep.mubr.f32.mxu0 %v310
    %522 = vmatmul.mubr.f32.gmra.mrb[0].mxu0 %v309
    %v523 = vpop.f32.mrb[0].mxu0
    %v524 = vadd.f32 %v390, %v523
    %v525 = vpop.f32.mrb[0].mxu0
    %v526 = vadd.f32 %v394, %v525
    %527 = vmatprep.mubr.f32.mxu0 %v312
    %528 = vmatmul.mubr.f32.gmra.mrb[0].mxu0 %v311
    %v529 = vpop.f32.mrb[0].mxu0
    %v530 = vadd.f32 %v390, %v529
    %v531 = vpop.f32.mrb[0].mxu0
    %v532 = vadd.f32 %v394, %v531
    %533 = vmatprep.mubr.f32.mxu0 %v314
    %534 = vmatmul.mubr.f32.gmra.mrb[0].mxu0 %v313
    %v535 = vpop.f32.mrb[0].mxu0
    %v536 = vadd.f32 %v390, %v535
    %v537 = vpop.f32.mrb[0].mxu0
    %v538 = vadd.f32 %v394, %v537
    %539 = vmatprep.mubr.f32.mxu0 %v316
    %540 = vmatmul.mubr.f32.gmra.mrb[0].mxu0 %v315
    %v541 = vpop.f32.mrb[0].mxu0
    %v542 = vadd.f32 %v390, %v541
    %v543 = vpop.f32.mrb[0].mxu0
    %v544 = vadd.f32 %v394, %v543
    %545 = vmatprep.mubr.f32.mxu0 %v318
    %546 = vmatmul.mubr.f32.gmra.mrb[0].mxu0 %v317
    %v547 = vpop.f32.mrb[0].mxu0
    %v548 = vadd.f32 %v390, %v547
    %v549 = vpop.f32.mrb[0].mxu0
    %v550 = vadd.f32 %v394, %v549
    %551 = vmatprep.mubr.f32.mxu0 %v320
    %552 = vmatmul.mubr.f32.gmra.mrb[0].mxu0 %v319
    %v553 = vpop.f32.mrb[0].mxu0
    %v554 = vadd.f32 %v390, %v553
    %v555 = vpop.f32.mrb[0].mxu0
    %v556 = vadd.f32 %v394, %v555
    %557 = vdwg.mxu0
    %v558 = vmax.f32 %v464, 0.0
    %v559 = vmax.f32 %v466, 0.0
    %v560 = vmax.f32 %v470, 0.0
    %v561 = vmax.f32 %v472, 0.0
    %v562 = vmax.f32 %v476, 0.0
    %v563 = vmax.f32 %v478, 0.0
    %v564 = vmax.f32 %v482, 0.0
    %v565 = vmax.f32 %v484, 0.0
    %v566 = vmax.f32 %v488, 0.0
    %v567 = vmax.f32 %v490, 0.0
    %v568 = vmax.f32 %v494, 0.0
    %v569 = vmax.f32 %v496, 0.0
    %v570 = vmax.f32 %v500, 0.0
    %v571 = vmax.f32 %v502, 0.0
    %v572 = vmax.f32 %v506, 0.0
    %v573 = vmax.f32 %v508, 0.0
    %v574 = vmax.f32 %v512, 0.0
    %v575 = vmax.f32 %v514, 0.0
    %v576 = vmax.f32 %v518, 0.0
    %v577 = vmax.f32 %v520, 0.0
    %v578 = vmax.f32 %v524, 0.0
    %v579 = vmax.f32 %v526, 0.0
    %v580 = vmax.f32 %v530, 0.0
    %v581 = vmax.f32 %v532, 0.0
    %v582 = vmax.f32 %v536, 0.0
    %v583 = vmax.f32 %v538, 0.0
    %v584 = vmax.f32 %v542, 0.0
    %v585 = vmax.f32 %v544, 0.0
    %v586 = vmax.f32 %v548, 0.0
    %v587 = vmax.f32 %v550, 0.0
    %v588 = vmax.f32 %v554, 0.0
    %v589 = vmax.f32 %v556, 0.0
    %v590 = vld [vmem:[%s5] sm:$0x3]
    %v592 = vlaneseq
    %v593 = vshrl.u32 %v592, 7
    %v594 = vsub.s32 0, %v593
    %v595 = vrot.slane %v590, %v594
    %v596 = vlaneseq
    %v597 = vshrl.u32 %v596, 7
    %v598 = vsub.s32 1, %v597
    %v599 = vrot.slane %v590, %v598
    %v602 = vmul.f32 %v558, %v595
    %v603 = vmul.f32 %v559, %v599
    %v604 = vmul.f32 %v560, %v595
    %v605 = vmul.f32 %v561, %v599
    %v606 = vmul.f32 %v562, %v595
    %v607 = vmul.f32 %v563, %v599
    %v608 = vmul.f32 %v564, %v595
    %v609 = vmul.f32 %v565, %v599
    %v610 = vmul.f32 %v566, %v595
    %v611 = vmul.f32 %v567, %v599
    %v612 = vmul.f32 %v568, %v595
    %v613 = vmul.f32 %v569, %v599
    %v614 = vmul.f32 %v570, %v595
    %v615 = vmul.f32 %v571, %v599
    %v616 = vmul.f32 %v572, %v595
    %v617 = vmul.f32 %v573, %v599
    %v618 = vmul.f32 %v574, %v595
    %v619 = vmul.f32 %v575, %v599
    %v620 = vmul.f32 %v576, %v595
    %v621 = vmul.f32 %v577, %v599
    %v622 = vmul.f32 %v578, %v595
    %v623 = vmul.f32 %v579, %v599
    %v624 = vmul.f32 %v580, %v595
    %v625 = vmul.f32 %v581, %v599
    %v626 = vmul.f32 %v582, %v595
    %v627 = vmul.f32 %v583, %v599
    %v628 = vmul.f32 %v584, %v595
    %v629 = vmul.f32 %v585, %v599
    %v630 = vmul.f32 %v586, %v595
    %v631 = vmul.f32 %v587, %v599
    %v632 = vmul.f32 %v588, %v595
    %v633 = vmul.f32 %v589, %v599
    %v634 = vadd.f32 %v602, %v603
    %635 = vadd.xlane.f32.xlu0 %v634
    %v636 = vpop.xlane.xlu0 %635
    %v637 = vadd.f32 %v604, %v605
    %638 = vadd.xlane.f32.xlu0 %v637
    %v639 = vpop.xlane.xlu0 %638
    %v640 = vadd.f32 %v606, %v607
    %641 = vadd.xlane.f32.xlu0 %v640
    %v642 = vpop.xlane.xlu0 %641
    %v643 = vadd.f32 %v608, %v609
    %644 = vadd.xlane.f32.xlu0 %v643
    %v645 = vpop.xlane.xlu0 %644
    %v646 = vadd.f32 %v610, %v611
    %647 = vadd.xlane.f32.xlu0 %v646
    %v648 = vpop.xlane.xlu0 %647
    %v649 = vadd.f32 %v612, %v613
    %650 = vadd.xlane.f32.xlu0 %v649
    %v651 = vpop.xlane.xlu0 %650
    %v652 = vadd.f32 %v614, %v615
    %653 = vadd.xlane.f32.xlu0 %v652
    %v654 = vpop.xlane.xlu0 %653
    %v655 = vadd.f32 %v616, %v617
    %656 = vadd.xlane.f32.xlu0 %v655
    %v657 = vpop.xlane.xlu0 %656
    %v658 = vadd.f32 %v618, %v619
    %659 = vadd.xlane.f32.xlu0 %v658
    %v660 = vpop.xlane.xlu0 %659
    %v661 = vadd.f32 %v620, %v621
    %662 = vadd.xlane.f32.xlu0 %v661
    %v663 = vpop.xlane.xlu0 %662
    %v664 = vadd.f32 %v622, %v623
    %665 = vadd.xlane.f32.xlu0 %v664
    %v666 = vpop.xlane.xlu0 %665
    %v667 = vadd.f32 %v624, %v625
    %668 = vadd.xlane.f32.xlu0 %v667
    %v669 = vpop.xlane.xlu0 %668
    %v670 = vadd.f32 %v626, %v627
    %671 = vadd.xlane.f32.xlu0 %v670
    %v672 = vpop.xlane.xlu0 %671
    %v673 = vadd.f32 %v628, %v629
    %674 = vadd.xlane.f32.xlu0 %v673
    %v675 = vpop.xlane.xlu0 %674
    %v676 = vadd.f32 %v630, %v631
    %677 = vadd.xlane.f32.xlu0 %v676
    %v678 = vpop.xlane.xlu0 %677
    %v679 = vadd.f32 %v632, %v633
    %680 = vadd.xlane.f32.xlu0 %v679
    %v681 = vpop.xlane.xlu0 %680
    %v682 = vld [vmem:[#allocation2] sm:$0x1]
    %684 = vset.pattern.permute.xlu0 0
    %685 = vperm.xlu0 %684, %v682
    %v686 = vpop.permute.xlu0 %685
    %v688 = vlaneseq
    %v689 = vshrl.u32 %v688, 7
    %v690 = vsub.s32 0, %v689
    %v691 = vrot.slane %v686, %v690
    %v692 = vadd.f32 %v636, %v691
    %v693 = vadd.f32 %v639, %v691
    %v694 = vadd.f32 %v642, %v691
    %v695 = vadd.f32 %v645, %v691
    %v696 = vadd.f32 %v648, %v691
    %v697 = vadd.f32 %v651, %v691
    %v698 = vadd.f32 %v654, %v691
    %v699 = vadd.f32 %v657, %v691
    %v700 = vadd.f32 %v660, %v691
    %v701 = vadd.f32 %v663, %v691
    %v702 = vadd.f32 %v666, %v691
    %v703 = vadd.f32 %v669, %v691
    %v704 = vadd.f32 %v672, %v691
    %v705 = vadd.f32 %v675, %v691
    %v706 = vadd.f32 %v678, %v691
    %v707 = vadd.f32 %v681, %v691
    %v708 = vxor.u32 %v692, 2147483648
    %v709 = vxor.u32 %v693, 2147483648
    %v710 = vxor.u32 %v694, 2147483648
    %v711 = vxor.u32 %v695, 2147483648
    %v712 = vxor.u32 %v696, 2147483648
    %v713 = vxor.u32 %v697, 2147483648
    %v714 = vxor.u32 %v698, 2147483648
    %v715 = vxor.u32 %v699, 2147483648
    %v716 = vxor.u32 %v700, 2147483648
    %v717 = vxor.u32 %v701, 2147483648
    %v718 = vxor.u32 %v702, 2147483648
    %v719 = vxor.u32 %v703, 2147483648
    %v720 = vxor.u32 %v704, 2147483648
    %v721 = vxor.u32 %v705, 2147483648
    %v722 = vxor.u32 %v706, 2147483648
    %v723 = vxor.u32 %v707, 2147483648
    %v724 = vmul.f32 %v708, 1.442695
    %v725 = vpow.pop %v724
    %v726 = vmul.f32 %v709, 1.442695
    %v727 = vpow.pop %v726
    %v728 = vmul.f32 %v710, 1.442695
    %v729 = vpow.pop %v728
    %v730 = vmul.f32 %v711, 1.442695
    %v731 = vpow.pop %v730
    %v732 = vmul.f32 %v712, 1.442695
    %v733 = vpow.pop %v732
    %v734 = vmul.f32 %v713, 1.442695
    %v735 = vpow.pop %v734
    %v736 = vmul.f32 %v714, 1.442695
    %v737 = vpow.pop %v736
    %v738 = vmul.f32 %v715, 1.442695
    %v739 = vpow.pop %v738
    %v740 = vmul.f32 %v716, 1.442695
    %v741 = vpow.pop %v740
    %v742 = vmul.f32 %v717, 1.442695
    %v743 = vpow.pop %v742
    %v744 = vmul.f32 %v718, 1.442695
    %v745 = vpow.pop %v744
    %v746 = vmul.f32 %v719, 1.442695
    %v747 = vpow.pop %v746
    %v748 = vmul.f32 %v720, 1.442695
    %v749 = vpow.pop %v748
    %v750 = vmul.f32 %v721, 1.442695
    %v751 = vpow.pop %v750
    %v752 = vmul.f32 %v722, 1.442695
    %v753 = vpow.pop %v752
    %v754 = vmul.f32 %v723, 1.442695
    %v755 = vpow.pop %v754
    %v756 = vadd.f32 %v725, 1.0
    %v757 = vadd.f32 %v727, 1.0
    %v758 = vadd.f32 %v729, 1.0
    %v759 = vadd.f32 %v731, 1.0
    %v760 = vadd.f32 %v733, 1.0
    %v761 = vadd.f32 %v735, 1.0
    %v762 = vadd.f32 %v737, 1.0
    %v763 = vadd.f32 %v739, 1.0
    %v764 = vadd.f32 %v741, 1.0
    %v765 = vadd.f32 %v743, 1.0
    %v766 = vadd.f32 %v745, 1.0
    %v767 = vadd.f32 %v747, 1.0
    %v768 = vadd.f32 %v749, 1.0
    %v769 = vadd.f32 %v751, 1.0
    %v770 = vadd.f32 %v753, 1.0
    %v771 = vadd.f32 %v755, 1.0
    %v772 = vrcp.pop %v756
    %v773 = vmul.f32 1.0, %v772
    %v774 = vrcp.pop %v757
    %v775 = vmul.f32 1.0, %v774
    %v776 = vrcp.pop %v758
    %v777 = vmul.f32 1.0, %v776
    %v778 = vrcp.pop %v759
    %v779 = vmul.f32 1.0, %v778
    %v780 = vrcp.pop %v760
    %v781 = vmul.f32 1.0, %v780
    %v782 = vrcp.pop %v761
    %v783 = vmul.f32 1.0, %v782
    %v784 = vrcp.pop %v762
    %v785 = vmul.f32 1.0, %v784
    %v786 = vrcp.pop %v763
    %v787 = vmul.f32 1.0, %v786
    %v788 = vrcp.pop %v764
    %v789 = vmul.f32 1.0, %v788
    %v790 = vrcp.pop %v765
    %v791 = vmul.f32 1.0, %v790
    %v792 = vrcp.pop %v766
    %v793 = vmul.f32 1.0, %v792
    %v794 = vrcp.pop %v767
    %v795 = vmul.f32 1.0, %v794
    %v796 = vrcp.pop %v768
    %v797 = vmul.f32 1.0, %v796
    %v798 = vrcp.pop %v769
    %v799 = vmul.f32 1.0, %v798
    %v800 = vrcp.pop %v770
    %v801 = vmul.f32 1.0, %v800
    %v802 = vrcp.pop %v771
    %v803 = vmul.f32 1.0, %v802
    %v820 = vlaneseq
    %v821 = vand.u32 %v820, 127
    %v822 = vlaneseq
    %v823 = vshrl.u32 %v822, 7
    %v824 = vsub.s32 %v821, %v823
    %v825 = vrot.slane %v773, %v824
    %v826 = vadd.s32 %v821, 4294967288
    %v827 = vlaneseq
    %v828 = vshrl.u32 %v827, 7
    %v829 = vsub.s32 %v826, %v828
    %v830 = vrot.slane %v775, %v829
    %vm831 = vcmask 130112
    %v832 = vsel %vm831, %v830, %v825
    %v833 = vadd.s32 %v821, 4294967280
    %v834 = vlaneseq
    %v835 = vshrl.u32 %v834, 7
    %v836 = vsub.s32 %v833, %v835
    %v837 = vrot.slane %v777, %v836
    %vm838 = vcmask 195712
    %v839 = vsel %vm838, %v837, %v832
    %v840 = vadd.s32 %v821, 4294967272
    %v841 = vlaneseq
    %v842 = vshrl.u32 %v841, 7
    %v843 = vsub.s32 %v840, %v842
    %v844 = vrot.slane %v779, %v843
    %vm845 = vcmask 261312
    %v846 = vsel %vm845, %v844, %v839
    %v847 = vadd.s32 %v821, 4294967264
    %v848 = vlaneseq
    %v849 = vshrl.u32 %v848, 7
    %v850 = vsub.s32 %v847, %v849
    %v851 = vrot.slane %v781, %v850
    %vm852 = vcmask 326912
    %v853 = vsel %vm852, %v851, %v846
    %v854 = vadd.s32 %v821, 4294967256
    %v855 = vlaneseq
    %v856 = vshrl.u32 %v855, 7
    %v857 = vsub.s32 %v854, %v856
    %v858 = vrot.slane %v783, %v857
    %vm859 = vcmask 392512
    %v860 = vsel %vm859, %v858, %v853
    %v861 = vadd.s32 %v821, 4294967248
    %v862 = vlaneseq
    %v863 = vshrl.u32 %v862, 7
    %v864 = vsub.s32 %v861, %v863
    %v865 = vrot.slane %v785, %v864
    %vm866 = vcmask 458112
    %v867 = vsel %vm866, %v865, %v860
    %v868 = vadd.s32 %v821, 4294967240
    %v869 = vlaneseq
    %v870 = vshrl.u32 %v869, 7
    %v871 = vsub.s32 %v868, %v870
    %v872 = vrot.slane %v787, %v871
    %vm873 = vcmask 523712
    %v874 = vsel %vm873, %v872, %v867
    %v875 = vadd.s32 %v821, 4294967232
    %v876 = vlaneseq
    %v877 = vshrl.u32 %v876, 7
    %v878 = vsub.s32 %v875, %v877
    %v879 = vrot.slane %v789, %v878
    %vm880 = vcmask 589312
    %v881 = vsel %vm880, %v879, %v874
    %v882 = vadd.s32 %v821, 4294967224
    %v883 = vlaneseq
    %v884 = vshrl.u32 %v883, 7
    %v885 = vsub.s32 %v882, %v884
    %v886 = vrot.slane %v791, %v885
    %vm887 = vcmask 654912
    %v888 = vsel %vm887, %v886, %v881
    %v889 = vadd.s32 %v821, 4294967216
    %v890 = vlaneseq
    %v891 = vshrl.u32 %v890, 7
    %v892 = vsub.s32 %v889, %v891
    %v893 = vrot.slane %v793, %v892
    %vm894 = vcmask 720512
    %v895 = vsel %vm894, %v893, %v888
    %v896 = vadd.s32 %v821, 4294967208
    %v897 = vlaneseq
    %v898 = vshrl.u32 %v897, 7
    %v899 = vsub.s32 %v896, %v898
    %v900 = vrot.slane %v795, %v899
    %vm901 = vcmask 786112
    %v902 = vsel %vm901, %v900, %v895
    %v903 = vadd.s32 %v821, 4294967200
    %v904 = vlaneseq
    %v905 = vshrl.u32 %v904, 7
    %v906 = vsub.s32 %v903, %v905
    %v907 = vrot.slane %v797, %v906
    %vm908 = vcmask 851712
    %v909 = vsel %vm908, %v907, %v902
    %v910 = vadd.s32 %v821, 4294967192
    %v911 = vlaneseq
    %v912 = vshrl.u32 %v911, 7
    %v913 = vsub.s32 %v910, %v912
    %v914 = vrot.slane %v799, %v913
    %vm915 = vcmask 917312
    %v916 = vsel %vm915, %v914, %v909
    %v917 = vadd.s32 %v821, 4294967184
    %v918 = vlaneseq
    %v919 = vshrl.u32 %v918, 7
    %v920 = vsub.s32 %v917, %v919
    %v921 = vrot.slane %v801, %v920
    %vm922 = vcmask 982912
    %v923 = vsel %vm922, %v921, %v916
    %v924 = vadd.s32 %v821, 4294967176
    %v925 = vlaneseq
    %v926 = vshrl.u32 %v925, 7
    %v927 = vsub.s32 %v924, %v926
    %v928 = vrot.slane %v803, %v927
    %vm929 = vcmask 1048512
    %v930 = vsel %vm929, %v928, %v923
    %932 = vst [vmem:[#allocation6] sm:$0x1] %v930
    // Predicated region
    $region34: #{tpu_custom_call.1} parent=1 // pred_check
      _
    $region35: #{tpu_custom_call.1} parent=1 // pred_check_branch
      %934 = sbr.rel (0) target = $region37
    $region36: #{tpu_custom_call.1} parent=1 // pred_region
      %s936 = ssub.s32 16, 16
      %937 = vsyncadd [#allocation5], %s936
      %s939 = sshll.u32 [#allocation6], 4
      %s940 = int_to_ptr.vmem [resolvable:$true] %s939
      %942 = dma.vmem_to_hbm [thread:$0]  %s940, 16, %s7, [#allocation5]
    $region37: #{tpu_custom_call.1} parent=1 // pred_fallthru
      _
    // Predicated region
    $region38: #{tpu_custom_call.1} parent=1 // pred_check
      _
    $region39: #{tpu_custom_call.1} parent=1 // pred_check_branch
      %944 = sbr.rel (0) target = $region41
    $region40: #{tpu_custom_call.1} parent=1 // pred_region
      %945 = dma.done [#allocation5], 16
    $region41: #{tpu_custom_call.1} parent=1 // pred_fallthru
      _
    %946 = vsyncpa [#allocation4], 1
    %947 = vsyncpa [#allocation5], 1

</llo_original>
